<compile_context>
chip_gen: v7x
topology: tpu7x:2x2x1
jax: 0.10.0
libtpu: 0.0.40
codegen_flags: <defaults>
</compile_context>

<pallas_src>
import jax
import jax.numpy as jnp
from jax.experimental import pallas as pl
from jax.experimental.pallas import tpu as pltpu


def lookup_kernel(emb_ref, o_ref):
    # Pure passthrough: one dense block in, same dense block out.
    o_ref[...] = emb_ref[...]


def lookup_encoder(embeddings, x=None, edge_index=None, *, row_tile=256):
    """Pallas implementation of LookupEncoder.forward.

    `x` and `edge_index` are accepted for API parity with the PyTorch module
    but are ignored (the module performs no gather); they are NOT passed to
    the kernel so no useless DMA traffic is generated.
    """
    N, D = embeddings.shape

    if N <= row_tile:
        # Single program: copy the whole table at once (best for small N).
        grid = (1,)
        block = (N, D)
        index_map = lambda i: (0, 0)
    else:
        # Row-tiled copy: 256-row blocks (multiple of 8 sublanes), full D on
        # the lane axis.  Ragged last block is handled by Pallas masking.
        grid = (pl.cdiv(N, row_tile),)
        block = (row_tile, D)
        index_map = lambda i: (i, 0)

    nbytes = embeddings.size * embeddings.dtype.itemsize
    return pl.pallas_call(
        lookup_kernel,
        out_shape=jax.ShapeDtypeStruct((N, D), embeddings.dtype),
        grid_spec=pltpu.PrefetchScalarGridSpec(
            num_scalar_prefetch=0,
            grid=grid,
            in_specs=[pl.BlockSpec(block, index_map)],
            out_specs=pl.BlockSpec(block, index_map),
        ),
        compiler_params=pltpu.CompilerParams(
            dimension_semantics=("parallel",),
        ),
        cost_estimate=pl.CostEstimate(
            flops=0,
            transcendentals=0,
            bytes_accessed=2 * nbytes,  # read table + write output
        ),
    )(embeddings)


def reference_forward(embeddings, x=None, edge_index=None):
    # PyTorch forward simply returns the stored embeddings.
    return embeddings


if __name__ == "__main__":
    # Small, deterministic shapes consistent with the module:
    #   N = 64 nodes, D = 128 embedding dim (lane-dense).
    N, D = 64, 128

    key = jax.random.PRNGKey(0)
    k_emb, k_x = jax.random.split(key, 2)

    embeddings = jax.random.normal(k_emb, (N, D), dtype=jnp.float32)

    # Dummy runtime inputs, ignored by the forward (as in the PyTorch module).
    x = jax.random.normal(k_x, (N, 16), dtype=jnp.float32)
    edge_index = jnp.zeros((2, 128), dtype=jnp.int32)

    out = lookup_encoder(embeddings, x, edge_index)
    out = jax.block_until_ready(out)

    ref = reference_forward(embeddings, x, edge_index)
    assert out.shape == (N, D)
    assert out.dtype == embeddings.dtype
    assert jnp.array_equal(out, ref), "kernel output does not match embeddings"

    print("KERNEL_OK")
</pallas_src>

<mosaic_0001>
module attributes {stable_mosaic.version = 11 : i64} {
  func.func @lookup_kernel(%arg0: i32, %arg1: memref<64x128xf32, #tpu.memory_space<vmem>>, %arg2: memref<64x128xf32, #tpu.memory_space<vmem>>) attributes {dimension_semantics = [#tpu.dimension_semantics<parallel>], iteration_bounds = array<i64: 1>, scalar_prefetch = 0 : i64, scratch_operands = 0 : i64, tpu.core_type = #tpu.core_type<tc>, window_params = [{pipeline_mode = #tpu.pipeline_mode<synchronous>, transform_indices = @transform_0, window_bounds = array<i64: 64, 128>}, {pipeline_mode = #tpu.pipeline_mode<synchronous>, transform_indices = @transform_1, window_bounds = array<i64: 64, 128>}]} {
    %c0 = arith.constant 0 : index
    %c0_0 = arith.constant 0 : index
    %0 = vector.load %arg1[%c0, %c0_0] : memref<64x128xf32, #tpu.memory_space<vmem>>, vector<64x128xf32>
    %c0_1 = arith.constant 0 : index
    %c0_2 = arith.constant 0 : index
    %1 = vector.load %arg2[%c0_1, %c0_2] : memref<64x128xf32, #tpu.memory_space<vmem>>, vector<64x128xf32>
    tpu.vector_store %arg2[%c0_1, %c0_2], %0 {strides = array<i32>} : memref<64x128xf32, #tpu.memory_space<vmem>>, vector<64x128xf32>,
    return
  }
  func.func @transform_0(%arg0: i32) -> (i32, i32) {
    %c0_i32 = arith.constant 0 : i32
    %c0_i32_0 = arith.constant 0 : i32
    %c0_i32_1 = arith.constant 0 : i32
    return %c0_i32, %c0_i32_0 : i32, i32
  }
  func.func @transform_1(%arg0: i32) -> (i32, i32) {
    %c0_i32 = arith.constant 0 : i32
    %c0_i32_0 = arith.constant 0 : i32
    %c0_i32_1 = arith.constant 0 : i32
    return %c0_i32, %c0_i32_0 : i32, i32
  }
}

</mosaic_0001>

<llo_original>
// kernel: tpu_custom_call.1
$region0: #{tpu_custom_call.1}
  #allocation0 [shape = 'u32[]', space=smem, size = 0x4, offset = 0x4, fixed_abs, tag = 'smem constant byte address 0x4 - core index']
  #allocation1 [shape = 'u32[144,128]{1,0:T(1,128)}', space=vmem, size = 0x12000, scoped, tag = 'internal scratch']
  %s0 = inlined_call_operand.hbm [shape: f32[64,128], index: 0, kind: input, shape index: {}]
  %s1 = inlined_call_operand.hbm [shape: f32[64,128], index: 1, kind: output, shape index: {}]
  %s2 = sld [smem:[#allocation0]]
  $region18: #{tpu_custom_call.1} parent=0
    _
  %s4 = ssub.s32 1, %s2
  %s5 = scalar_select 0, %s4, %s2
  $region1: #{tpu_custom_call.1} parent=0
    #allocation2 [shape = 'u8[32768]{0}', space=vmem, size = 0x8000, scoped, tag = 'input window, operand 0, single buffered']
    #allocation3 [shape = 's32[1]{0}', space=sflag, size = 0x4, scoped, tag = 'scoped memory for tpu_custom_call.1']
    #allocation4 [shape = 's32[1]{0}', space=sflag, size = 0x4, scoped, tag = 'scoped memory for tpu_custom_call.1']
    #allocation5 [shape = 'u8[32768]{0}', space=vmem, size = 0x8000, scoped, tag = 'output window, operand 0, single buffered']
    %6 = vsyncpa [#allocation3], 0
    %7 = vsyncpa [#allocation4], 0
    // Predicated region
    $region2: #{tpu_custom_call.1} parent=1 // pred_check
      _
    $region3: #{tpu_custom_call.1} parent=1 // pred_check_branch
      %9 = sbr.rel (0) target = $region5
    $region4: #{tpu_custom_call.1} parent=1 // pred_region
      %s11 = ssub.s32 1024, 1024
      %12 = vsyncadd [#allocation3], %s11
      %s13 = sshll.u32 [#allocation2], 4
      %s14 = int_to_ptr.vmem [resolvable:$true] %s13
      %19 = dma.hbm_to_vmem [thread:$0]  %s0, 1024, %s14, [#allocation3], 128, 128, 8
    $region5: #{tpu_custom_call.1} parent=1 // pred_fallthru
      _
    // Predicated region
    $region6: #{tpu_custom_call.1} parent=1 // pred_check
      _
    $region7: #{tpu_custom_call.1} parent=1 // pred_check_branch
      %21 = sbr.rel (0) target = $region9
    $region8: #{tpu_custom_call.1} parent=1 // pred_region
      %22 = dma.done [#allocation3], 1024
    $region9: #{tpu_custom_call.1} parent=1 // pred_fallthru
      _
    %v23 = vld [vmem:[#allocation2] sm:$0xff]
    %v24 = vld [vmem:[#allocation2 + $0x8] sm:$0xff]
    %v25 = vld [vmem:[#allocation2 + $0x10] sm:$0xff]
    %v26 = vld [vmem:[#allocation2 + $0x18] sm:$0xff]
    %v27 = vld [vmem:[#allocation2 + $0x20] sm:$0xff]
    %v28 = vld [vmem:[#allocation2 + $0x28] sm:$0xff]
    %v29 = vld [vmem:[#allocation2 + $0x30] sm:$0xff]
    %v30 = vld [vmem:[#allocation2 + $0x38] sm:$0xff]
    %31 = vst [vmem:[#allocation5] sm:$0xff] %v23
    %32 = vst [vmem:[#allocation5 + $0x8] sm:$0xff] %v24
    %33 = vst [vmem:[#allocation5 + $0x10] sm:$0xff] %v25
    %34 = vst [vmem:[#allocation5 + $0x18] sm:$0xff] %v26
    %35 = vst [vmem:[#allocation5 + $0x20] sm:$0xff] %v27
    %36 = vst [vmem:[#allocation5 + $0x28] sm:$0xff] %v28
    %37 = vst [vmem:[#allocation5 + $0x30] sm:$0xff] %v29
    %38 = vst [vmem:[#allocation5 + $0x38] sm:$0xff] %v30
    // Predicated region
    $region10: #{tpu_custom_call.1} parent=1 // pred_check
      _
    $region11: #{tpu_custom_call.1} parent=1 // pred_check_branch
      %40 = sbr.rel (0) target = $region13
    $region12: #{tpu_custom_call.1} parent=1 // pred_region
      %s42 = ssub.s32 1024, 1024
      %43 = vsyncadd [#allocation4], %s42
      %s44 = sshll.u32 [#allocation5], 4
      %s45 = int_to_ptr.vmem [resolvable:$true] %s44
      %50 = dma.vmem_to_hbm [thread:$0]  %s45, 1024, %s1, [#allocation4], 128, 128, 8
    $region13: #{tpu_custom_call.1} parent=1 // pred_fallthru
      _
    // Predicated region
    $region14: #{tpu_custom_call.1} parent=1 // pred_check
      _
    $region15: #{tpu_custom_call.1} parent=1 // pred_check_branch
      %52 = sbr.rel (0) target = $region17
    $region16: #{tpu_custom_call.1} parent=1 // pred_region
      %53 = dma.done [#allocation4], 1024
    $region17: #{tpu_custom_call.1} parent=1 // pred_fallthru
      _
    %54 = vsyncpa [#allocation3], 1
    %55 = vsyncpa [#allocation4], 1

</llo_original>
